<compile_context>
chip_gen: v6e
topology: v6e:2x2x1
jax: 0.10.0
libtpu: 0.0.40
codegen_flags: <defaults>
</compile_context>

<pallas_src>
import jax
import jax.numpy as jnp
from jax.experimental import pallas as pl
from jax.experimental.pallas import tpu as pltpu


def linear_sub_relu_kernel(x_ref, w_ref, bo_ref, o_ref):
    # y = relu(x @ W_t + (bias - other))
    y = jnp.dot(x_ref[...], w_ref[...], preferred_element_type=jnp.float32)  # MXU, f32 acc
    o_ref[...] = jnp.maximum(y + bo_ref[...], 0.0).astype(o_ref.dtype)


def prepare_params(weight_out_in, bias, other):
    """One-time (model-load) parameter prep, kept OUT of the jitted per-call path.

    weight_out_in: (OUT, IN) — PyTorch nn.Linear layout.
    bias:          (OUT,)
    other:         (1, OUT) or (OUT,) — the Parameter subtracted after the linear.
    Returns (w_t, bo) with w_t: (IN, OUT), bo: (1, OUT).
    """
    w_t = jnp.asarray(weight_out_in, dtype=jnp.float32).T            # [in, out]
    bo = (jnp.asarray(bias, dtype=jnp.float32)
          - jnp.asarray(other, dtype=jnp.float32).reshape(-1)).reshape(1, -1)
    return w_t, bo


def model_forward(x, w_t, bo):
    """x: (B, IN) f32; w_t: (IN, OUT) f32; bo: (1, OUT) f32."""
    B, IN = x.shape
    OUT = w_t.shape[1]
    cost = pl.CostEstimate(
        flops=2 * B * IN * OUT,
        transcendentals=0,
        bytes_accessed=4 * (B * IN + IN * OUT + OUT + B * OUT),
    )
    return pl.pallas_call(
        linear_sub_relu_kernel,
        out_shape=jax.ShapeDtypeStruct((B, OUT), jnp.float32),
        in_specs=[
            pl.BlockSpec(memory_space=pltpu.MemorySpace.VMEM),
            pl.BlockSpec(memory_space=pltpu.MemorySpace.VMEM),
            pl.BlockSpec(memory_space=pltpu.MemorySpace.VMEM),
        ],
        out_specs=pl.BlockSpec(memory_space=pltpu.MemorySpace.VMEM),
        cost_estimate=cost,
    )(x, w_t, bo)


if __name__ == "__main__":
    key = jax.random.PRNGKey(0)
    k_x, k_w, k_b, k_o = jax.random.split(key, 4)

    B, IN, OUT = 1, 100, 100
    # Deterministic synthetic params mirroring nn.Linear(100,100) (PyTorch [out,in]
    # layout) + Parameter(randn(100).view(1,100)).
    x = jax.random.normal(k_x, (B, IN), dtype=jnp.float32)
    bound = 1.0 / (IN ** 0.5)
    weight = jax.random.uniform(k_w, (OUT, IN), minval=-bound, maxval=bound, dtype=jnp.float32)
    bias = jax.random.uniform(k_b, (OUT,), minval=-bound, maxval=bound, dtype=jnp.float32)
    other = jax.random.normal(k_o, (1, OUT), dtype=jnp.float32)

    # One-time parameter prep (outside jit).
    w_t, bo = prepare_params(weight, bias, other)
    w_t = jax.block_until_ready(w_t)
    bo = jax.block_until_ready(bo)

    fwd = jax.jit(model_forward)
    out = fwd(x, w_t, bo)
    jax.block_until_ready(out)

    # Reference check in plain JAX, matching the PyTorch module:
    # relu((x @ W.T + bias) - other.squeeze())
    ref = jnp.maximum((x @ weight.T + bias) - other.reshape(-1), 0.0)
    assert out.shape == (B, OUT)
    assert jnp.allclose(out, ref, atol=1e-5, rtol=1e-5)

    print("KERNEL_OK")
</pallas_src>

<mosaic_0001>
module attributes {stable_mosaic.version = 11 : i64} {
  func.func @linear_sub_relu_kernel(%arg0: memref<1x100xf32, #tpu.memory_space<vmem>>, %arg1: memref<100x100xf32, #tpu.memory_space<vmem>>, %arg2: memref<1x100xf32, #tpu.memory_space<vmem>>, %arg3: memref<1x100xf32, #tpu.memory_space<vmem>>) attributes {dimension_semantics = [], scalar_prefetch = 0 : i64, scratch_operands = 0 : i64, tpu.core_type = #tpu.core_type<tc>} {
    %c0 = arith.constant 0 : index
    %c0_0 = arith.constant 0 : index
    %0 = vector.load %arg0[%c0, %c0_0] : memref<1x100xf32, #tpu.memory_space<vmem>>, vector<1x100xf32>
    %c0_1 = arith.constant 0 : index
    %c0_2 = arith.constant 0 : index
    %1 = vector.load %arg1[%c0_1, %c0_2] : memref<100x100xf32, #tpu.memory_space<vmem>>, vector<100x100xf32>
    %cst = arith.constant dense<0.000000e+00> : vector<1x100xf32>
    %2 = tpu.matmul %0, %1, %cst {dimension_numbers = #tpu.dot_dimension_numbers<[1], [0], [0], [1], [0, 0, 1, 1], [], []>} : vector<1x100xf32>, vector<100x100xf32>, vector<1x100xf32> -> vector<1x100xf32>
    %c0_3 = arith.constant 0 : index
    %c0_4 = arith.constant 0 : index
    %3 = vector.load %arg2[%c0_3, %c0_4] : memref<1x100xf32, #tpu.memory_space<vmem>>, vector<1x100xf32>
    %4 = arith.addf %2, %3 : vector<1x100xf32>
    %cst_5 = arith.constant 0.000000e+00 : f32
    %5 = vector.broadcast %cst_5 : f32 to vector<1x100xf32>
    %6 = arith.maximumf %4, %5 : vector<1x100xf32>
    %c0_6 = arith.constant 0 : index
    %c0_7 = arith.constant 0 : index
    %7 = vector.load %arg3[%c0_6, %c0_7] : memref<1x100xf32, #tpu.memory_space<vmem>>, vector<1x100xf32>
    tpu.vector_store %arg3[%c0_6, %c0_7], %6 {strides = array<i32>} : memref<1x100xf32, #tpu.memory_space<vmem>>, vector<1x100xf32>,
    return
  }
}

</mosaic_0001>

<llo_original>
// kernel: model_forward.1
$region0: #{model_forward.1}
  #allocation0 [shape = 'u32[]', space=smem, size = 0x4, offset = 0x4, fixed_abs, tag = 'smem constant byte address 0x4 - core index']
  #allocation1 [shape = 'u32[144,128]{1,0:T(1,128)}', space=vmem, size = 0x12000, scoped, tag = 'internal scratch']
  %s0 = inlined_call_operand.hbm [shape: f32[1,100], index: 0, kind: input, shape index: {}]
  %s1 = inlined_call_operand.hbm [shape: f32[100,100], index: 1, kind: input, shape index: {}]
  %s2 = inlined_call_operand.vmem [shape: f32[1,100], index: 2, kind: input, shape index: {}]
  %s3 = inlined_call_operand.hbm [shape: f32[1,100], index: 3, kind: output, shape index: {}]
  %s4 = sld [smem:[#allocation0]]
  $region30: #{model_forward.1} parent=0
    _
  %s6 = ssub.s32 1, %s4
  %s7 = scalar_select 0, %s6, %s4
  $region1: #{model_forward.1} parent=0
    #allocation2 [shape = 'u8[512]{0}', space=vmem, size = 0x400, scoped, tag = 'input window, operand 0, single buffered']
    #allocation3 [shape = 's32[1]{0}', space=sflag, size = 0x4, scoped, tag = 'scoped memory for model_forward.1']
    #allocation4 [shape = 's32[1]{0}', space=sflag, size = 0x4, scoped, tag = 'scoped memory for model_forward.1']
    #allocation5 [shape = 'u8[53248]{0}', space=vmem, size = 0xd000, scoped, tag = 'input window, operand 1, single buffered']
    #allocation6 [shape = 's32[1]{0}', space=sflag, size = 0x4, scoped, tag = 'scoped memory for model_forward.1']
    #allocation7 [shape = 'u8[512]{0}', space=vmem, size = 0x400, scoped, tag = 'output window, operand 0, single buffered']
    %8 = vsyncpa [#allocation3], 0
    %9 = vsyncpa [#allocation6], 0
    %10 = vsyncpa [#allocation4], 0
    // Predicated region
    $region2: #{model_forward.1} parent=1 // pred_check
      _
    $region3: #{model_forward.1} parent=1 // pred_check_branch
      %12 = sbr.rel (0) target = $region5
    $region4: #{model_forward.1} parent=1 // pred_region
      %s14 = ssub.s32 16, 16
      %15 = vsyncadd [#allocation3], %s14
      %s17 = sshll.u32 [#allocation2], 4
      %s18 = int_to_ptr.vmem [resolvable:$true] %s17
      %20 = dma.hbm_to_vmem [thread:$0]  %s0, 16, %s18, [#allocation3]
    $region5: #{model_forward.1} parent=1 // pred_fallthru
      _
    // Predicated region
    $region6: #{model_forward.1} parent=1 // pred_check
      _
    $region7: #{model_forward.1} parent=1 // pred_check_branch
      %22 = sbr.rel (0) target = $region9
    $region8: #{model_forward.1} parent=1 // pred_region
      %s24 = ssub.s32 1664, 1664
      %25 = vsyncadd [#allocation6], %s24
      %s26 = sshll.u32 [#allocation5], 4
      %s27 = int_to_ptr.vmem [resolvable:$true] %s26
      %32 = dma.hbm_to_vmem [thread:$0]  %s1, 1664, %s27, [#allocation6], 128, 128, 8
    $region9: #{model_forward.1} parent=1 // pred_fallthru
      _
    // Predicated region
    $region10: #{model_forward.1} parent=1 // pred_check
      _
    $region11: #{model_forward.1} parent=1 // pred_check_branch
      %34 = sbr.rel (0) target = $region13
    $region12: #{model_forward.1} parent=1 // pred_region
      _
    $region13: #{model_forward.1} parent=1 // pred_fallthru
      _
    // Predicated region
    $region14: #{model_forward.1} parent=1 // pred_check
      _
    $region15: #{model_forward.1} parent=1 // pred_check_branch
      %36 = sbr.rel (0) target = $region17
    $region16: #{model_forward.1} parent=1 // pred_region
      %37 = dma.done [#allocation3], 16
    $region17: #{model_forward.1} parent=1 // pred_fallthru
      _
    // Predicated region
    $region18: #{model_forward.1} parent=1 // pred_check
      _
    $region19: #{model_forward.1} parent=1 // pred_check_branch
      %39 = sbr.rel (0) target = $region21
    $region20: #{model_forward.1} parent=1 // pred_region
      %40 = dma.done [#allocation6], 1664
    $region21: #{model_forward.1} parent=1 // pred_fallthru
      _
    %v41 = vld [vmem:[#allocation2] sm:$0x1]
    %v42 = vld [vmem:[#allocation5] sm:$0xff]
    %v43 = vld [vmem:[#allocation5 + $0x8] sm:$0xff]
    %v44 = vld [vmem:[#allocation5 + $0x10] sm:$0xff]
    %v45 = vld [vmem:[#allocation5 + $0x18] sm:$0xff]
    %v46 = vld [vmem:[#allocation5 + $0x20] sm:$0xff]
    %v47 = vld [vmem:[#allocation5 + $0x28] sm:$0xff]
    %v48 = vld [vmem:[#allocation5 + $0x30] sm:$0xff]
    %v49 = vld [vmem:[#allocation5 + $0x38] sm:$0xff]
    %v50 = vld [vmem:[#allocation5 + $0x40] sm:$0xff]
    %v51 = vld [vmem:[#allocation5 + $0x48] sm:$0xff]
    %v52 = vld [vmem:[#allocation5 + $0x50] sm:$0xff]
    %v53 = vld [vmem:[#allocation5 + $0x58] sm:$0xff]
    %v54 = vld [vmem:[#allocation5 + $0x60] sm:$0xf]
    %v55 = vld [vmem:[%s2] sm:$0x1]
    %vm56 = vcmask 818176
    %v58 = vsel %vm56, %v41, 0
    %vm60 = vcmask 1043456
    %v62 = vsel %vm60, %v54, 0
    %64 = vmatprep.subr.mxu0 0.0
    %65 = vmatpush1.msra.mxu0 0.0
    %66 = vmatprep.subr.mxu0 0.0
    %67 = vmatpush1.msra.mxu0 0.0
    %68 = vmatprep.subr.mxu0 0.0
    %69 = vmatpush1.msra.mxu0 0.0
    %70 = vmatprep.subr.mxu0 0.0
    %71 = vmatpush1.msra.mxu0 %v62
    %72 = vmatprep.subr.mxu0 0.0
    %73 = vmatpush1.msra.mxu0 %v53
    %74 = vmatprep.subr.mxu0 0.0
    %75 = vmatpush1.msra.mxu0 %v52
    %76 = vmatprep.subr.mxu0 0.0
    %77 = vmatpush1.msra.mxu0 %v51
    %78 = vmatprep.subr.mxu0 0.0
    %79 = vmatpush1.msra.mxu0 %v50
    %80 = vmatprep.subr.mxu0 0.0
    %81 = vmatpush1.msra.mxu0 %v49
    %82 = vmatprep.subr.mxu0 0.0
    %83 = vmatpush1.msra.mxu0 %v48
    %84 = vmatprep.subr.mxu0 0.0
    %85 = vmatpush1.msra.mxu0 %v47
    %86 = vmatprep.subr.mxu0 0.0
    %87 = vmatpush1.msra.mxu0 %v46
    %88 = vmatprep.subr.mxu0 0.0
    %89 = vmatpush1.msra.mxu0 %v45
    %90 = vmatprep.subr.mxu0 0.0
    %91 = vmatpush1.msra.mxu0 %v44
    %92 = vmatprep.subr.mxu0 0.0
    %93 = vmatpush1.msra.mxu0 %v43
    %94 = vmatprep.subr.mxu0 0.0
    %95 = vmatpush1.msra.mxu0 %v42
    %96 = vmatprep.subr.mxu0 0.0
    %97 = vmatpush2.msra.mxu0 0.0
    %98 = vmatprep.subr.mxu0 0.0
    %99 = vmatpush2.msra.mxu0 0.0
    %100 = vmatprep.subr.mxu0 0.0
    %101 = vmatpush2.msra.mxu0 0.0
    %102 = vmatprep.subr.mxu0 0.0
    %103 = vmatpush2.msra.mxu0 0.0
    %104 = vmatprep.subr.mxu0 0.0
    %105 = vmatpush2.msra.mxu0 0.0
    %106 = vmatprep.subr.mxu0 0.0
    %107 = vmatpush2.msra.mxu0 0.0
    %108 = vmatprep.subr.mxu0 0.0
    %109 = vmatpush2.msra.mxu0 0.0
    %110 = vmatprep.subr.mxu0 0.0
    %111 = vmatpush2.msra.mxu0 0.0
    %112 = vmatprep.subr.mxu0 0.0
    %113 = vmatpush2.msra.mxu0 0.0
    %114 = vmatprep.subr.mxu0 0.0
    %115 = vmatpush2.msra.mxu0 0.0
    %116 = vmatprep.subr.mxu0 0.0
    %117 = vmatpush2.msra.mxu0 0.0
    %118 = vmatprep.subr.mxu0 0.0
    %119 = vmatpush2.msra.mxu0 0.0
    %120 = vmatprep.subr.mxu0 0.0
    %121 = vmatpush2.msra.mxu0 0.0
    %122 = vmatprep.subr.mxu0 0.0
    %123 = vmatpush2.msra.mxu0 0.0
    %124 = vmatprep.subr.mxu0 0.0
    %125 = vmatpush2.msra.mxu0 0.0
    %126 = vmatprep.subr.mxu0 0.0
    %127 = vmatpush2.msra.mxu0 0.0
    %128 = vmatprep.mubr.f32.mxu0 0.0
    %129 = vmatmul.mubr.f32.gmra.mxu0 %v58
    %v130 = vpop.f32.mrf.mxu0
    %v131 = vadd.f32 %v55, %v130
    %v132 = vpop.f32.mrf.mxu0
    %133 = vdwg.mxu0
    %v134 = vmax.f32 %v131, 0.0
    %vm135 = vcmask 811008
    %136 = vst.msk [vmem:[#allocation7] sm:$0x1] %vm135, %v134
    // Predicated region
    $region22: #{model_forward.1} parent=1 // pred_check
      _
    $region23: #{model_forward.1} parent=1 // pred_check_branch
      %138 = sbr.rel (0) target = $region25
    $region24: #{model_forward.1} parent=1 // pred_region
      %s140 = ssub.s32 16, 16
      %141 = vsyncadd [#allocation4], %s140
      %s143 = sshll.u32 [#allocation7], 4
      %s144 = int_to_ptr.vmem [resolvable:$true] %s143
      %146 = dma.vmem_to_hbm [thread:$0]  %s144, 16, %s3, [#allocation4]
    $region25: #{model_forward.1} parent=1 // pred_fallthru
      _
    // Predicated region
    $region26: #{model_forward.1} parent=1 // pred_check
      _
    $region27: #{model_forward.1} parent=1 // pred_check_branch
      %148 = sbr.rel (0) target = $region29
    $region28: #{model_forward.1} parent=1 // pred_region
      %149 = dma.done [#allocation4], 16
    $region29: #{model_forward.1} parent=1 // pred_fallthru
      _
    %150 = vsyncpa [#allocation3], 1
    %151 = vsyncpa [#allocation6], 1
    %152 = vsyncpa [#allocation4], 1

</llo_original>
